<compile_context>
chip_gen: v6e
topology: v6e:2x2x1
jax: 0.10.0
libtpu: 0.0.40
codegen_flags: <defaults>
</compile_context>

<pallas_src>
import math

import jax
import jax.numpy as jnp
from jax.experimental import pallas as pl
from jax.experimental.pallas import tpu as pltpu


def get_slopes(n):
    """Same slope schedule as the PyTorch module."""
    def get_slopes_power_of_2(n):
        start = 2 ** (-(2 ** (-(math.log2(n) - 3))))
        ratio = start
        return [start * ratio ** i for i in range(n)]

    if math.log2(n).is_integer():
        return get_slopes_power_of_2(n)
    closest = 2 ** math.floor(math.log2(n))
    return (get_slopes_power_of_2(closest)
            + get_slopes(2 * closest)[0::2][: n - closest])


# ---------------------------------------------------------------------------
# Kernels
# ---------------------------------------------------------------------------

def _alibi_small_kernel(neg_slopes_ref, out_ref):
    """Single-step kernel for tiny total size: whole (H, Sq, Sk) slab at once."""
    H, sq, sk = out_ref.shape
    rows = jax.lax.broadcasted_iota(jnp.int32, (sq, sk), 0)   # context pos i
    cols = jax.lax.broadcasted_iota(jnp.int32, (sq, sk), 1)   # memory  pos j
    rel = jnp.abs(cols - rows).astype(jnp.float32)            # |j - i|
    for h in range(H):                                        # H static & small here
        out_ref[h, :, :] = (neg_slopes_ref[h] * rel).astype(out_ref.dtype)


def _alibi_tiled_kernel(neg_slopes_ref, out_ref):
    """Head-folded tiled kernel: grid = (H_chunks, Sq_tiles, Sk_tiles).

    neg_slopes_ref: SMEM (H_padded,) float32 (already negated, as in the module)
    out_ref:        VMEM (Hc, TSq, TSk) output block for heads
                    [hg*Hc, hg*Hc + Hc) at tile (i, j).
    """
    hg = pl.program_id(0)  # head-chunk index
    i = pl.program_id(1)   # Sq tile index
    j = pl.program_id(2)   # Sk tile index
    hc, tsq, tsk = out_ref.shape

    # |j - i| for this tile, computed once and reused across the head chunk.
    rows = jax.lax.broadcasted_iota(jnp.int32, (tsq, tsk), 0) + i * tsq
    cols = jax.lax.broadcasted_iota(jnp.int32, (tsq, tsk), 1) + j * tsk
    rel = jnp.abs(cols - rows).astype(jnp.float32)

    for h in range(hc):                                       # hc is static
        slope = neg_slopes_ref[hg * hc + h]                   # dynamic SMEM read
        out_ref[h, :, :] = (slope * rel).astype(out_ref.dtype)


# ---------------------------------------------------------------------------
# Wrapper
# ---------------------------------------------------------------------------

def _round_up(x, m):
    return ((x + m - 1) // m) * m


# ~8 MiB per output block: double-buffered output (~16 MiB) plus the in-kernel
# f32 |j-i| intermediates stay well under the explicit 32 MiB scoped-VMEM
# limit below (safe on v5e's 128 MiB / v7x's 64 MiB physical VMEM) while
# amortizing the ~0.35 us per-grid-step overhead even at v7x HBM speeds.
_BLOCK_BYTES_CAP = 8 * 1024 * 1024
_SMALL_PATH_BYTES = 2 * 1024 * 1024
_VMEM_LIMIT_BYTES = 32 * 1024 * 1024


def _choose_tiles(H, sq, sk, itemsize):
    """Pick (head_chunk, tsq, tsk) giving lane-dense, dtype-tile-aligned blocks."""
    # Packed sublane tile: (8,128) f32, (16,128) bf16, (32,128) int8/fp8.
    sub = {4: 8, 2: 16, 1: 32}.get(itemsize, 8)
    tsk = sk if sk < 128 else min(2048, _round_up(sk, 128))
    row_budget = max(sub, _BLOCK_BYTES_CAP // (tsk * itemsize))  # total Hc*TSq rows

    tsq_full = sq if sq < sub else _round_up(sq, sub)
    if H * sub <= row_budget:
        # Fold all heads into every block.
        hc = H
        tsq = min(tsq_full, max(sub, (row_budget // H) // sub * sub), 2048)
        if sq < sub:
            tsq = sq
    else:
        # Very large H: one sublane-tile of rows per step, chunk the heads.
        hc = max(1, row_budget // sub)
        tsq = sq if sq < sub else sub
    return hc, tsq, tsk


def alibi_forward(x, neg_slopes, *, out_dtype=jnp.float32,
                  head_chunk=None, tile_sq=None, tile_sk=None):
    """Returns the (H, Sq, Sk) ALiBi bias: out[h, i, j] = neg_slopes[h] * |j - i|.

    x is (B, H, Sq, Sk); only x.shape[2]/x.shape[3] are used (as in the module).
    out_dtype defaults to float32 (matches the PyTorch buffer); pass
    jnp.bfloat16 to halve HBM write traffic for attention-logit consumers.
    """
    _, H, Sq, Sk = x.shape
    neg_slopes = jnp.asarray(neg_slopes, jnp.float32).reshape(H)
    itemsize = jnp.dtype(out_dtype).itemsize
    total_bytes = H * Sq * Sk * itemsize
    explicit_tiles = any(t is not None for t in (head_chunk, tile_sq, tile_sk))

    if total_bytes <= _SMALL_PATH_BYTES and not explicit_tiles:
        # Single grid step: whole output in one slab, slopes in SMEM.
        return pl.pallas_call(
            _alibi_small_kernel,
            out_shape=jax.ShapeDtypeStruct((H, Sq, Sk), out_dtype),
            in_specs=[pl.BlockSpec(memory_space=pltpu.SMEM)],
        )(neg_slopes)

    auto_hc, auto_sq, auto_sk = _choose_tiles(H, Sq, Sk, itemsize)
    hc = head_chunk if head_chunk is not None else auto_hc
    tsq = tile_sq if tile_sq is not None else auto_sq
    tsk = tile_sk if tile_sk is not None else auto_sk

    grid = (pl.cdiv(H, hc), pl.cdiv(Sq, tsq), pl.cdiv(Sk, tsk))

    # Pad the slope vector so dynamic SMEM reads in a partial head-chunk block
    # (when hc does not divide H) stay in-bounds; the extra outputs are masked
    # away by the partial-block writeback anyway.
    padded_h = grid[0] * hc
    if padded_h != H:
        neg_slopes = jnp.pad(neg_slopes, (0, padded_h - H))

    return pl.pallas_call(
        _alibi_tiled_kernel,
        out_shape=jax.ShapeDtypeStruct((H, Sq, Sk), out_dtype),
        grid=grid,
        in_specs=[pl.BlockSpec(memory_space=pltpu.SMEM)],   # whole slope vector
        out_specs=pl.BlockSpec((hc, tsq, tsk), lambda hg, i, j: (hg, i, j)),
        compiler_params=pltpu.CompilerParams(
            dimension_semantics=("parallel", "parallel", "parallel"),
            vmem_limit_bytes=_VMEM_LIMIT_BYTES),
    )(neg_slopes)


# ---------------------------------------------------------------------------
# Smoke tests
# ---------------------------------------------------------------------------

def _reference_f32(neg_slopes, sq, sk):
    i = jnp.arange(sq)[:, None]
    j = jnp.arange(sk)[None, :]
    rel = jnp.abs(j - i).astype(jnp.float32)
    return neg_slopes[:, None, None] * rel[None, :, :]


if __name__ == "__main__":
    key = jax.random.PRNGKey(0)

    # --- Test 1: module-sized small input (small path, f32 like the buffer) ---
    B, H, Sq, Sk = 2, 4, 16, 16
    # x's values are irrelevant (only its shape is used) but mirrors forward(x).
    x = jax.random.normal(key, (B, H, Sq, Sk), dtype=jnp.float32)
    neg_slopes = -jnp.asarray(get_slopes(H), dtype=jnp.float32)

    out = jax.block_until_ready(alibi_forward(x, neg_slopes))
    ref = _reference_f32(neg_slopes, Sq, Sk)
    assert out.shape == (H, Sq, Sk), out.shape
    assert out.dtype == jnp.float32, out.dtype
    assert jnp.allclose(out, ref, atol=1e-6), float(jnp.max(jnp.abs(out - ref)))

    # --- Test 2: tiled path, multi-step grid with head chunking (checks global
    #     iota offsets, partial head block + slope padding) --------------------
    B2, H2, Sq2, Sk2 = 1, 6, 64, 256
    x2 = jax.random.normal(jax.random.PRNGKey(0), (B2, H2, Sq2, Sk2),
                           dtype=jnp.float32)
    neg_slopes2 = -jnp.asarray(get_slopes(H2), dtype=jnp.float32)
    out2 = jax.block_until_ready(
        alibi_forward(x2, neg_slopes2, head_chunk=4, tile_sq=32, tile_sk=128))
    ref2 = _reference_f32(neg_slopes2, Sq2, Sk2)
    assert out2.shape == (H2, Sq2, Sk2), out2.shape
    assert jnp.allclose(out2, ref2, atol=1e-6), \
        float(jnp.max(jnp.abs(out2 - ref2)))

    # --- Test 3: auto-tiled path with bf16 output (halved HBM writes) ---------
    B3, H3, Sq3, Sk3 = 1, 8, 256, 640
    x3 = jax.random.normal(jax.random.PRNGKey(0), (B3, H3, Sq3, Sk3),
                           dtype=jnp.float32)
    neg_slopes3 = -jnp.asarray(get_slopes(H3), dtype=jnp.float32)
    out3 = jax.block_until_ready(
        alibi_forward(x3, neg_slopes3, out_dtype=jnp.bfloat16))
    ref3 = _reference_f32(neg_slopes3, Sq3, Sk3).astype(jnp.bfloat16)
    assert out3.shape == (H3, Sq3, Sk3), out3.shape
    assert out3.dtype == jnp.bfloat16, out3.dtype
    assert jnp.allclose(out3.astype(jnp.float32), ref3.astype(jnp.float32),
                        rtol=1e-2, atol=1e-2), \
        float(jnp.max(jnp.abs(out3.astype(jnp.float32)
                              - ref3.astype(jnp.float32))))

    print("KERNEL_OK")
</pallas_src>

<mosaic_0001>
module attributes {stable_mosaic.version = 11 : i64} {
  func.func @_alibi_small_kernel(%arg0: memref<4xf32, #tpu.memory_space<smem>>, %arg1: memref<4x16x16xf32, #tpu.memory_space<vmem>>) attributes {dimension_semantics = [], scalar_prefetch = 0 : i64, scratch_operands = 0 : i64, tpu.core_type = #tpu.core_type<tc>} {
    %0 = tpu.iota {dimensions = array<i32: 0>} : vector<16x16xi32>
    %1 = tpu.iota {dimensions = array<i32: 1>} : vector<16x16xi32>
    %2 = arith.subi %1, %0 : vector<16x16xi32>
    %3 = math.absi %2 : vector<16x16xi32>
    %4 = arith.sitofp %3 : vector<16x16xi32> to vector<16x16xf32>
    %c0 = arith.constant 0 : index
    %5 = memref.load %arg0[%c0] : memref<4xf32, #tpu.memory_space<smem>>
    %6 = vector.broadcast %5 : f32 to vector<16x16xf32>
    %7 = arith.mulf %6, %4 : vector<16x16xf32>
    %c0_0 = arith.constant 0 : index
    %c0_1 = arith.constant 0 : index
    %c0_2 = arith.constant 0 : index
    %8 = vector.load %arg1[%c0_0, %c0_1, %c0_2] : memref<4x16x16xf32, #tpu.memory_space<vmem>>, vector<1x16x16xf32>
    %9 = vector.shape_cast %8 : vector<1x16x16xf32> to vector<16x16xf32>
    %10 = vector.shape_cast %7 : vector<16x16xf32> to vector<1x16x16xf32>
    tpu.vector_store %arg1[%c0_0, %c0_1, %c0_2], %10 {strides = array<i32>} : memref<4x16x16xf32, #tpu.memory_space<vmem>>, vector<1x16x16xf32>,
    %c1 = arith.constant 1 : index
    %11 = memref.load %arg0[%c1] : memref<4xf32, #tpu.memory_space<smem>>
    %12 = vector.broadcast %11 : f32 to vector<16x16xf32>
    %13 = arith.mulf %12, %4 : vector<16x16xf32>
    %c1_3 = arith.constant 1 : index
    %c0_4 = arith.constant 0 : index
    %c0_5 = arith.constant 0 : index
    %14 = vector.load %arg1[%c1_3, %c0_4, %c0_5] : memref<4x16x16xf32, #tpu.memory_space<vmem>>, vector<1x16x16xf32>
    %15 = vector.shape_cast %14 : vector<1x16x16xf32> to vector<16x16xf32>
    %16 = vector.shape_cast %13 : vector<16x16xf32> to vector<1x16x16xf32>
    tpu.vector_store %arg1[%c1_3, %c0_4, %c0_5], %16 {strides = array<i32>} : memref<4x16x16xf32, #tpu.memory_space<vmem>>, vector<1x16x16xf32>,
    %c2 = arith.constant 2 : index
    %17 = memref.load %arg0[%c2] : memref<4xf32, #tpu.memory_space<smem>>
    %18 = vector.broadcast %17 : f32 to vector<16x16xf32>
    %19 = arith.mulf %18, %4 : vector<16x16xf32>
    %c2_6 = arith.constant 2 : index
    %c0_7 = arith.constant 0 : index
    %c0_8 = arith.constant 0 : index
    %20 = vector.load %arg1[%c2_6, %c0_7, %c0_8] : memref<4x16x16xf32, #tpu.memory_space<vmem>>, vector<1x16x16xf32>
    %21 = vector.shape_cast %20 : vector<1x16x16xf32> to vector<16x16xf32>
    %22 = vector.shape_cast %19 : vector<16x16xf32> to vector<1x16x16xf32>
    tpu.vector_store %arg1[%c2_6, %c0_7, %c0_8], %22 {strides = array<i32>} : memref<4x16x16xf32, #tpu.memory_space<vmem>>, vector<1x16x16xf32>,
    %c3 = arith.constant 3 : index
    %23 = memref.load %arg0[%c3] : memref<4xf32, #tpu.memory_space<smem>>
    %24 = vector.broadcast %23 : f32 to vector<16x16xf32>
    %25 = arith.mulf %24, %4 : vector<16x16xf32>
    %c3_9 = arith.constant 3 : index
    %c0_10 = arith.constant 0 : index
    %c0_11 = arith.constant 0 : index
    %26 = vector.load %arg1[%c3_9, %c0_10, %c0_11] : memref<4x16x16xf32, #tpu.memory_space<vmem>>, vector<1x16x16xf32>
    %27 = vector.shape_cast %26 : vector<1x16x16xf32> to vector<16x16xf32>
    %28 = vector.shape_cast %25 : vector<16x16xf32> to vector<1x16x16xf32>
    tpu.vector_store %arg1[%c3_9, %c0_10, %c0_11], %28 {strides = array<i32>} : memref<4x16x16xf32, #tpu.memory_space<vmem>>, vector<1x16x16xf32>,
    return
  }
}

</mosaic_0001>

<llo_original>
// kernel: tpu_custom_call.1
$region0: #{tpu_custom_call.1}
  #allocation0 [shape = 'u32[]', space=smem, size = 0x4, offset = 0x4, fixed_abs, tag = 'smem constant byte address 0x4 - core index']
  #allocation1 [shape = 'u32[144,128]{1,0:T(1,128)}', space=vmem, size = 0x12000, scoped, tag = 'internal scratch']
  %s0 = inlined_call_operand.hbm [shape: f32[4], index: 0, kind: input, shape index: {}]
  %s1 = inlined_call_operand.hbm [shape: f32[4,16,16], index: 1, kind: output, shape index: {}]
  %s2 = sld [smem:[#allocation0]]
  $region18: #{tpu_custom_call.1} parent=0
    _
  %s4 = ssub.s32 1, %s2
  %s5 = scalar_select 0, %s4, %s2
  $region1: #{tpu_custom_call.1} parent=0
    #allocation2 [shape = 'u8[512]{0}', space=smem, size = 0x200, scoped, tag = 'input window, operand 0, single buffered']
    #allocation3 [shape = 's32[1]{0}', space=sflag, size = 0x4, scoped, tag = 'scoped memory for tpu_custom_call.1']
    #allocation4 [shape = 's32[1]{0}', space=sflag, size = 0x4, scoped, tag = 'scoped memory for tpu_custom_call.1']
    #allocation5 [shape = 'u8[32768]{0}', space=vmem, size = 0x8000, scoped, tag = 'output window, operand 0, single buffered']
    %6 = vsyncpa [#allocation4], 0
    %7 = vsyncpa [#allocation3], 0
    // Predicated region
    $region2: #{tpu_custom_call.1} parent=1 // pred_check
      _
    $region3: #{tpu_custom_call.1} parent=1 // pred_check_branch
      %9 = sbr.rel (0) target = $region5
    $region4: #{tpu_custom_call.1} parent=1 // pred_region
      %s11 = ssub.s32 16, 16
      %12 = vsyncadd [#allocation4], %s11
      %15 = dma.hbm_to_smem %s0, 16, [#allocation2], [#allocation4]
    $region5: #{tpu_custom_call.1} parent=1 // pred_fallthru
      _
    // Predicated region
    $region6: #{tpu_custom_call.1} parent=1 // pred_check
      _
    $region7: #{tpu_custom_call.1} parent=1 // pred_check_branch
      %17 = sbr.rel (0) target = $region9
    $region8: #{tpu_custom_call.1} parent=1 // pred_region
      %18 = dma.done [#allocation4], 16
    $region9: #{tpu_custom_call.1} parent=1 // pred_fallthru
      _
    %19 = sfence
    %v20 = vlaneseq
    %v21 = vshrl.u32 %v20, 7
    %v22 = vadd.s32 %v21, 8
    %v23 = vlaneseq
    %v24 = vand.u32 %v23, 127
    %v25 = vsub.s32 %v24, %v21
    %v26 = vsub.s32 %v24, %v22
    %vm27 = vcmp.lt.s32.totalorder %v25, 0
    %v28 = vsub.s32 0, %v25
    %v29 = vsel %vm27, %v28, %v25
    %vm30 = vcmp.lt.s32.totalorder %v26, 0
    %v31 = vsub.s32 0, %v26
    %v32 = vsel %vm30, %v31, %v26
    %v33 = vcvt.s32.f32 %v29
    %v34 = vcvt.s32.f32 %v32
    %s35 = sld [smem:[#allocation2]]
    %v36 = vstv %s35
    %v37 = vmul.f32 %v36, %v33
    %v38 = vmul.f32 %v36, %v34
    %vm39 = vcmask 130048
    %40 = vst.msk [vmem:[#allocation5] sm:$0xff] %vm39, %v37
    %41 = vst.msk [vmem:[#allocation5 + $0x8] sm:$0xff] %vm39, %v38
    %s42 = sld [smem:[#allocation2 + $0x1]]
    %v43 = vstv %s42
    %v44 = vmul.f32 %v43, %v33
    %v45 = vmul.f32 %v43, %v34
    %s46 = scalar_lea.vmem [#allocation5], 16
    %47 = vst.msk [vmem:[%s46] sm:$0xff] %vm39, %v44
    %48 = vst.msk [vmem:[%s46 + $0x8] sm:$0xff] %vm39, %v45
    %s49 = sld [smem:[#allocation2 + $0x2]]
    %v50 = vstv %s49
    %v51 = vmul.f32 %v50, %v33
    %v52 = vmul.f32 %v50, %v34
    %s53 = scalar_lea.vmem [#allocation5], 32
    %54 = vst.msk [vmem:[%s53] sm:$0xff] %vm39, %v51
    %55 = vst.msk [vmem:[%s53 + $0x8] sm:$0xff] %vm39, %v52
    %s56 = sld [smem:[#allocation2 + $0x3]]
    %v57 = vstv %s56
    %v58 = vmul.f32 %v57, %v33
    %v59 = vmul.f32 %v57, %v34
    %s60 = scalar_lea.vmem [#allocation5], 48
    %61 = vst.msk [vmem:[%s60] sm:$0xff] %vm39, %v58
    %62 = vst.msk [vmem:[%s60 + $0x8] sm:$0xff] %vm39, %v59
    // Predicated region
    $region10: #{tpu_custom_call.1} parent=1 // pred_check
      _
    $region11: #{tpu_custom_call.1} parent=1 // pred_check_branch
      %64 = sbr.rel (0) target = $region13
    $region12: #{tpu_custom_call.1} parent=1 // pred_region
      %s66 = ssub.s32 1024, 1024
      %67 = vsyncadd [#allocation3], %s66
      %s68 = sshll.u32 [#allocation5], 4
      %s69 = int_to_ptr.vmem [resolvable:$true] %s68
      %74 = dma.vmem_to_hbm [thread:$0]  %s69, 1024, %s1, [#allocation3], 128, 128, 8
    $region13: #{tpu_custom_call.1} parent=1 // pred_fallthru
      _
    // Predicated region
    $region14: #{tpu_custom_call.1} parent=1 // pred_check
      _
    $region15: #{tpu_custom_call.1} parent=1 // pred_check_branch
      %76 = sbr.rel (0) target = $region17
    $region16: #{tpu_custom_call.1} parent=1 // pred_region
      %77 = dma.done [#allocation3], 1024
    $region17: #{tpu_custom_call.1} parent=1 // pred_fallthru
      _
    %78 = vsyncpa [#allocation3], 1
    %79 = vsyncpa [#allocation4], 1

</llo_original>
